<compile_context>
chip_gen: v7x
topology: tpu7x:2x2x1
jax: 0.10.0
libtpu: 0.0.40
codegen_flags: <defaults>
</compile_context>

<pallas_src>
import functools

import jax
import jax.numpy as jnp
from jax.experimental import pallas as pl
from jax.experimental.pallas import tpu as pltpu


def _csph_decoding_kernel(x_ref, w1_ref, b1_ref, w2_ref, b2_ref, o_ref):
    """Fused temporal+spatial 1x1 decoding for one batch element / spatial tile.

    x_ref : (k*Mt, ts)   CSPH codes (channels*time on sublanes, spatial on lanes)
    w1_ref: (Nt, k*Mt)   block-scattered Conv3d 1x1x1 weight, b1_ref: (Nt, 1)
    w2_ref: (Q, Nt)      Conv2d 1x1 weight (Q = Nt*up^2),     b2_ref: (Q, 1)
    o_ref : (Q, ts)      pre-PixelShuffle output
    """
    x = x_ref[...]                                            # (k*Mt, ts) f32
    # Temporal 1x1x1 conv + bias + ReLU as one MXU matmul (K = k*Mt).
    y = jnp.dot(w1_ref[...], x, preferred_element_type=jnp.float32) + b1_ref[...]
    y = jnp.maximum(y, 0.0)                                   # (Nt, ts)
    # Spatial 1x1 conv + bias + ReLU as one MXU matmul (K = Nt).
    z = jnp.dot(w2_ref[...], y, preferred_element_type=jnp.float32) + b2_ref[...]
    o_ref[...] = jnp.maximum(z, 0.0).astype(o_ref.dtype)      # (Q, ts)


@functools.partial(jax.jit, static_argnames=("up_factor", "spatial_tile"))
def csph_decoding_layer_fwd(inputs, w1, b1, w2, b2, *, up_factor, spatial_tile=None):
    """inputs: (B, k, Mt, Mr, Mc); returns (B, 1, Nt, Mr*up, Mc*up)."""
    B, k, Mt, Mr, Mc = inputs.shape
    T, k2 = w1.shape
    assert k2 == k
    Nt = Mt * T
    Q, Nt2 = w2.shape
    assert Nt2 == Nt
    assert Q == Nt * up_factor * up_factor
    S = Mr * Mc
    KMt = k * Mt

    # Spatial tile: largest tile that fits comfortably; ensure >= 2 parallel
    # grid steps when B == 1 so both v7x TensorCores get work.
    if spatial_tile is None:
        ts = S
        if B < 2 and S % 256 == 0:
            ts = S // 2
    else:
        ts = spatial_tile
    assert S % ts == 0, "spatial_tile must divide Mr*Mc"
    assert ts == S or ts % 128 == 0, "spatial_tile must be full or a multiple of 128"

    # Contiguous reshape only -- no HBM transpose of the input.
    x = inputs.reshape(B, KMt, S).astype(jnp.float32)

    # Block-scattered temporal weight:
    #   W1_big[t*T + c, ki*Mt + t2] = w1[c, ki] * (t == t2)
    #   b1_big[t*T + c]             = b1[c]
    # so Y = relu(W1_big @ X + b1_big) is already in nt = t*T + c order,
    # exactly reproducing the permute(0,2,1,3,4)+reshape of the PyTorch module.
    eye = jnp.eye(Mt, dtype=jnp.float32)
    w1_big = jnp.einsum("ck,ts->tcks", w1.astype(jnp.float32), eye)
    w1_big = w1_big.reshape(Nt, KMt)
    b1_big = jnp.tile(b1.astype(jnp.float32), (Mt,)).reshape(Nt, 1)
    w2f = w2.astype(jnp.float32)
    b2c = b2.reshape(Q, 1).astype(jnp.float32)

    flops = 2 * B * S * (Nt * KMt + Q * Nt) + 2 * B * S * (Nt + Q)
    bytes_accessed = 4 * (B * KMt * S + B * Q * S + Nt * KMt + Nt + Q * Nt + Q)

    z = pl.pallas_call(
        _csph_decoding_kernel,
        out_shape=jax.ShapeDtypeStruct((B, Q, S), jnp.float32),
        grid_spec=pl.GridSpec(
            grid=(B, S // ts),
            in_specs=[
                pl.BlockSpec((None, KMt, ts), lambda b, s: (b, 0, s)),
                pl.BlockSpec((Nt, KMt), lambda b, s: (0, 0)),
                pl.BlockSpec((Nt, 1), lambda b, s: (0, 0)),
                pl.BlockSpec((Q, Nt), lambda b, s: (0, 0)),
                pl.BlockSpec((Q, 1), lambda b, s: (0, 0)),
            ],
            out_specs=pl.BlockSpec((None, Q, ts), lambda b, s: (b, 0, s)),
        ),
        compiler_params=pltpu.CompilerParams(
            dimension_semantics=("parallel", "parallel")),
        cost_estimate=pl.CostEstimate(
            flops=flops, transcendentals=0, bytes_accessed=bytes_accessed),
    )(x, w1_big, b1_big, w2f, b2c)

    # nn.PixelShuffle(up): (B, Nt*up^2, Mr, Mc) -> (B, Nt, Mr*up, Mc*up),
    # then unsqueeze(1).  Done on the small kernel output in the wrapper.
    up = up_factor
    z = z.reshape(B, Nt, up, up, Mr, Mc)
    z = jnp.transpose(z, (0, 1, 4, 2, 5, 3))
    out = z.reshape(B, Nt, Mr * up, Mc * up)
    return out[:, None]


def _reference(inputs, w1, b1, w2, b2, up):
    """Pure-JAX mirror of CSPHDecodingLayer.forward."""
    B, k, Mt, Mr, Mc = inputs.shape
    T = w1.shape[0]
    Nt = Mt * T
    # Conv3d(k -> T, 1x1x1) + ReLU
    y = jnp.einsum('ck,bkthw->bcthw', w1, inputs) + b1[None, :, None, None, None]
    y = jnp.maximum(y, 0.0)
    # permute(0,2,1,3,4) + reshape -> (B, Nt, Mr, Mc)
    y = jnp.transpose(y, (0, 2, 1, 3, 4)).reshape(B, Nt, Mr, Mc)
    # Conv2d(Nt -> Nt*up^2, 1x1) + ReLU
    z = jnp.einsum('qn,bnhw->bqhw', w2, y) + b2[None, :, None, None]
    z = jnp.maximum(z, 0.0)
    # PixelShuffle(up)
    z = z.reshape(B, Nt, up, up, Mr, Mc)
    z = jnp.transpose(z, (0, 1, 4, 2, 5, 3)).reshape(B, Nt, Mr * up, Mc * up)
    return z[:, None]


if __name__ == "__main__":
    # Small shapes consistent with the module:
    #   k=8 codes, num_bins=64, nt_blocks=4 -> tblock_len=16, input Mt equals
    #   nt_blocks; 16x16 spatial, up_factor_xydim=2, batch=2.
    B, k, num_bins, nt_blocks, up = 2, 8, 64, 4, 2
    T = num_bins // nt_blocks          # tblock_len = 16
    Mt, Mr, Mc = nt_blocks, 16, 16
    Nt = num_bins
    Q = Nt * up * up                   # Conv2d out channels = 256

    key = jax.random.PRNGKey(0)
    k1, k2, k3, k4, k5 = jax.random.split(key, 5)
    inputs = jax.random.normal(k1, (B, k, Mt, Mr, Mc), dtype=jnp.float32)
    w1 = jax.random.normal(k2, (T, k), dtype=jnp.float32) / jnp.sqrt(float(k))
    b1 = jax.random.normal(k3, (T,), dtype=jnp.float32) * 0.1
    w2 = jax.random.normal(k4, (Q, Nt), dtype=jnp.float32) / jnp.sqrt(float(Nt))
    b2 = jax.random.normal(k5, (Q,), dtype=jnp.float32) * 0.1

    out = csph_decoding_layer_fwd(inputs, w1, b1, w2, b2, up_factor=up)
    out = jax.block_until_ready(out)

    ref = _reference(inputs, w1, b1, w2, b2, up)
    assert out.shape == (B, 1, Nt, Mr * up, Mc * up)
    assert jnp.allclose(out, ref, atol=1e-4, rtol=1e-4)

    print("KERNEL_OK")
</pallas_src>

<mosaic_0001>
module attributes {stable_mosaic.version = 11 : i64} {
  func.func @_csph_decoding_kernel(%arg0: i32, %arg1: i32, %arg2: memref<1x32x256xf32, #tpu.memory_space<vmem>>, %arg3: memref<64x32xf32, #tpu.memory_space<vmem>>, %arg4: memref<64x1xf32, #tpu.memory_space<vmem>>, %arg5: memref<256x64xf32, #tpu.memory_space<vmem>>, %arg6: memref<256x1xf32, #tpu.memory_space<vmem>>, %arg7: memref<1x256x256xf32, #tpu.memory_space<vmem>>) attributes {dimension_semantics = [#tpu.dimension_semantics<parallel>, #tpu.dimension_semantics<parallel>], iteration_bounds = array<i64: 2, 1>, scalar_prefetch = 0 : i64, scratch_operands = 0 : i64, tpu.core_type = #tpu.core_type<tc>, window_params = [{transform_indices = @transform_0, window_bounds = array<i64: 1, 32, 256>}, {pipeline_mode = #tpu.pipeline_mode<synchronous>, transform_indices = @transform_1, window_bounds = array<i64: 64, 32>}, {pipeline_mode = #tpu.pipeline_mode<synchronous>, transform_indices = @transform_2, window_bounds = array<i64: 64, 1>}, {pipeline_mode = #tpu.pipeline_mode<synchronous>, transform_indices = @transform_3, window_bounds = array<i64: 256, 64>}, {pipeline_mode = #tpu.pipeline_mode<synchronous>, transform_indices = @transform_4, window_bounds = array<i64: 256, 1>}, {transform_indices = @transform_5, window_bounds = array<i64: 1, 256, 256>}]} {
    %c0 = arith.constant 0 : index
    %c0_0 = arith.constant 0 : index
    %c0_1 = arith.constant 0 : index
    %0 = vector.load %arg2[%c0, %c0_0, %c0_1] : memref<1x32x256xf32, #tpu.memory_space<vmem>>, vector<1x32x256xf32>
    %1 = vector.shape_cast %0 : vector<1x32x256xf32> to vector<32x256xf32>
    %c0_2 = arith.constant 0 : index
    %c0_3 = arith.constant 0 : index
    %2 = vector.load %arg3[%c0_2, %c0_3] : memref<64x32xf32, #tpu.memory_space<vmem>>, vector<64x32xf32>
    %cst = arith.constant dense<0.000000e+00> : vector<64x256xf32>
    %3 = tpu.matmul %2, %1, %cst {dimension_numbers = #tpu.dot_dimension_numbers<[1], [0], [0], [1], [0, 0, 1, 1], [], []>} : vector<64x32xf32>, vector<32x256xf32>, vector<64x256xf32> -> vector<64x256xf32>
    %c0_4 = arith.constant 0 : index
    %c0_5 = arith.constant 0 : index
    %4 = vector.load %arg4[%c0_4, %c0_5] : memref<64x1xf32, #tpu.memory_space<vmem>>, vector<64x1xf32>
    %5 = vector.broadcast %4 : vector<64x1xf32> to vector<64x256xf32>
    %6 = arith.addf %3, %5 : vector<64x256xf32>
    %cst_6 = arith.constant 0.000000e+00 : f32
    %7 = vector.broadcast %cst_6 : f32 to vector<64x256xf32>
    %8 = arith.maximumf %6, %7 : vector<64x256xf32>
    %c0_7 = arith.constant 0 : index
    %c0_8 = arith.constant 0 : index
    %9 = vector.load %arg5[%c0_7, %c0_8] : memref<256x64xf32, #tpu.memory_space<vmem>>, vector<256x64xf32>
    %cst_9 = arith.constant dense<0.000000e+00> : vector<256x256xf32>
    %10 = tpu.matmul %9, %8, %cst_9 {dimension_numbers = #tpu.dot_dimension_numbers<[1], [0], [0], [1], [0, 0, 1, 1], [], []>} : vector<256x64xf32>, vector<64x256xf32>, vector<256x256xf32> -> vector<256x256xf32>
    %c0_10 = arith.constant 0 : index
    %c0_11 = arith.constant 0 : index
    %11 = vector.load %arg6[%c0_10, %c0_11] : memref<256x1xf32, #tpu.memory_space<vmem>>, vector<256x1xf32>
    %12 = vector.broadcast %11 : vector<256x1xf32> to vector<256x256xf32>
    %13 = arith.addf %10, %12 : vector<256x256xf32>
    %cst_12 = arith.constant 0.000000e+00 : f32
    %14 = vector.broadcast %cst_12 : f32 to vector<256x256xf32>
    %15 = arith.maximumf %13, %14 : vector<256x256xf32>
    %c0_13 = arith.constant 0 : index
    %c0_14 = arith.constant 0 : index
    %c0_15 = arith.constant 0 : index
    %16 = vector.load %arg7[%c0_13, %c0_14, %c0_15] : memref<1x256x256xf32, #tpu.memory_space<vmem>>, vector<1x256x256xf32>
    %17 = vector.shape_cast %16 : vector<1x256x256xf32> to vector<256x256xf32>
    %18 = vector.shape_cast %15 : vector<256x256xf32> to vector<1x256x256xf32>
    tpu.vector_store %arg7[%c0_13, %c0_14, %c0_15], %18 {strides = array<i32>} : memref<1x256x256xf32, #tpu.memory_space<vmem>>, vector<1x256x256xf32>,
    return
  }
  func.func @transform_0(%arg0: i32, %arg1: i32) -> (i32, i32, i32) {
    %c0_i32 = arith.constant 0 : i32
    %c0_i32_0 = arith.constant 0 : i32
    return %arg0, %c0_i32, %arg1 : i32, i32, i32
  }
  func.func @transform_1(%arg0: i32, %arg1: i32) -> (i32, i32) {
    %c0_i32 = arith.constant 0 : i32
    %c0_i32_0 = arith.constant 0 : i32
    %c0_i32_1 = arith.constant 0 : i32
    return %c0_i32, %c0_i32_0 : i32, i32
  }
  func.func @transform_2(%arg0: i32, %arg1: i32) -> (i32, i32) {
    %c0_i32 = arith.constant 0 : i32
    %c0_i32_0 = arith.constant 0 : i32
    %c0_i32_1 = arith.constant 0 : i32
    return %c0_i32, %c0_i32_0 : i32, i32
  }
  func.func @transform_3(%arg0: i32, %arg1: i32) -> (i32, i32) {
    %c0_i32 = arith.constant 0 : i32
    %c0_i32_0 = arith.constant 0 : i32
    %c0_i32_1 = arith.constant 0 : i32
    return %c0_i32, %c0_i32_0 : i32, i32
  }
  func.func @transform_4(%arg0: i32, %arg1: i32) -> (i32, i32) {
    %c0_i32 = arith.constant 0 : i32
    %c0_i32_0 = arith.constant 0 : i32
    %c0_i32_1 = arith.constant 0 : i32
    return %c0_i32, %c0_i32_0 : i32, i32
  }
  func.func @transform_5(%arg0: i32, %arg1: i32) -> (i32, i32, i32) {
    %c0_i32 = arith.constant 0 : i32
    %c0_i32_0 = arith.constant 0 : i32
    return %arg0, %c0_i32, %arg1 : i32, i32, i32
  }
}

</mosaic_0001>

<llo_original>
// kernel: tile.8
$region0: #{tile.8}
  #allocation2 [shape = 's32[1]{0}', space=sflag, size = 0x4, scoped, tag = 'scoped memory for tile.8']
  %s0 = inlined_call_operand.hbm [shape: f32[16], index: 0, kind: input, shape index: {}]
  %s1 = inlined_call_operand.vmem [shape: f32[4,16], index: 1, kind: output, shape index: {}]
  $region1: #{tile.8} parent=0
    #allocation0 [shape = 'u8[512]{0}', space=vmem, size = 0x400, scoped, tag = 'operand span for operand 0']
    #allocation1 [shape = 's32[1]{0}', space=sflag, size = 0x4, scoped, tag = 'scoped memory for tile.8']
    %2 = vsyncpa [#allocation1], 0
    // Predicated region
    $region2: #{tile.8} parent=1 // pred_check
      _
    $region3: #{tile.8} parent=1 // pred_check_branch
      %4 = sbr.rel (0) target = $region5
    $region4: #{tile.8} parent=1 // pred_region
      %s6 = ssub.s32 16, 16
      %7 = vsyncadd [#allocation1], %s6
      %s9 = sshll.u32 [#allocation0], 4
      %s10 = int_to_ptr.vmem [resolvable:$true] %s9
      %12 = dma.hbm_to_vmem [thread:$0]  %s0, 16, %s10, [#allocation1]
    $region5: #{tile.8} parent=1 // pred_fallthru
      _
    // Predicated region
    $region6: #{tile.8} parent=1 // pred_check
      _
    $region7: #{tile.8} parent=1 // pred_check_branch
      %14 = sbr.rel (0) target = $region9
    $region8: #{tile.8} parent=1 // pred_region
      %15 = dma.done [#allocation1], 16
    $region9: #{tile.8} parent=1 // pred_fallthru
      _
    %v16 = vld [vmem:[#allocation0] ss:$0 sm:$0xff]
    %17 = vst [vmem:[%s1] sm:$0xf] %v16
    %18 = vsyncpa [#allocation1], 1

// kernel: tile.0
$region0: #{tile.0}
  %s0 = inlined_call_operand.vmem [shape: f32[4,16], index: 0, kind: input, shape index: {}]
  %s1 = inlined_call_operand.vmem [shape: f32[64,1], index: 1, kind: output, shape index: {}]
  $region1: #{tile.0} parent=0
    #allocation0 [shape = 'u8[4096]{0}', space=vmem, size = 0x1000, scoped, tag = 'scoped mem for input reshape']
    %s3 = sshllo.u32 0, 4
    %v4 = vld [vmem:[%s0] sm:%s3]
    %5 = vst [vmem:[#allocation0] sm:%s3] %v4
    %v6 = vld [vmem:[#allocation0] sm:$0xf]
    %vm7 = vcmask 7168
    %8 = vst.msk [vmem:[%s1] ss:$16 sm:$0x3] %vm7, %v6
    %9 = vst.msk [vmem:[%s1] ss:$16 sm:$0xc] %vm7, %v6
    %v10 = vld [vmem:[#allocation0] sm:$0xf]
    %11 = vrot.lane.b32.xlu0 %v10, 127
    %v12 = vpop.permute.xlu0 %11
    %vm13 = vcmask 7168
    %s14 = scalar_lea.vmem %s1, 1
    %15 = vst.msk [vmem:[%s14] ss:$16 sm:$0x3] %vm13, %v12
    %s16 = scalar_lea.vmem %s1, 1
    %17 = vst.msk [vmem:[%s16] ss:$16 sm:$0xc] %vm13, %v12
    %v18 = vld [vmem:[#allocation0] sm:$0xf]
    %19 = vrot.lane.b32.xlu0 %v18, 126
    %v20 = vpop.permute.xlu0 %19
    %vm21 = vcmask 7168
    %s22 = scalar_lea.vmem %s1, 2
    %23 = vst.msk [vmem:[%s22] ss:$16 sm:$0x3] %vm21, %v20
    %s24 = scalar_lea.vmem %s1, 2
    %25 = vst.msk [vmem:[%s24] ss:$16 sm:$0xc] %vm21, %v20
    %v26 = vld [vmem:[#allocation0] sm:$0xf]
    %27 = vrot.lane.b32.xlu0 %v26, 125
    %v28 = vpop.permute.xlu0 %27
    %vm29 = vcmask 7168
    %s30 = scalar_lea.vmem %s1, 3
    %31 = vst.msk [vmem:[%s30] ss:$16 sm:$0x3] %vm29, %v28
    %s32 = scalar_lea.vmem %s1, 3
    %33 = vst.msk [vmem:[%s32] ss:$16 sm:$0xc] %vm29, %v28
    %v34 = vld [vmem:[#allocation0] sm:$0xf]
    %35 = vrot.lane.b32.xlu0 %v34, 124
    %v36 = vpop.permute.xlu0 %35
    %vm37 = vcmask 7168
    %s38 = scalar_lea.vmem %s1, 4
    %39 = vst.msk [vmem:[%s38] ss:$16 sm:$0x3] %vm37, %v36
    %s40 = scalar_lea.vmem %s1, 4
    %41 = vst.msk [vmem:[%s40] ss:$16 sm:$0xc] %vm37, %v36
    %v42 = vld [vmem:[#allocation0] sm:$0xf]
    %43 = vrot.lane.b32.xlu0 %v42, 123
    %v44 = vpop.permute.xlu0 %43
    %vm45 = vcmask 7168
    %s46 = scalar_lea.vmem %s1, 5
    %47 = vst.msk [vmem:[%s46] ss:$16 sm:$0x3] %vm45, %v44
    %s48 = scalar_lea.vmem %s1, 5
    %49 = vst.msk [vmem:[%s48] ss:$16 sm:$0xc] %vm45, %v44
    %v50 = vld [vmem:[#allocation0] sm:$0xf]
    %51 = vrot.lane.b32.xlu0 %v50, 122
    %v52 = vpop.permute.xlu0 %51
    %vm53 = vcmask 7168
    %s54 = scalar_lea.vmem %s1, 6
    %55 = vst.msk [vmem:[%s54] ss:$16 sm:$0x3] %vm53, %v52
    %s56 = scalar_lea.vmem %s1, 6
    %57 = vst.msk [vmem:[%s56] ss:$16 sm:$0xc] %vm53, %v52
    %v58 = vld [vmem:[#allocation0] sm:$0xf]
    %59 = vrot.lane.b32.xlu0 %v58, 121
    %v60 = vpop.permute.xlu0 %59
    %vm61 = vcmask 7168
    %s62 = scalar_lea.vmem %s1, 7
    %63 = vst.msk [vmem:[%s62] ss:$16 sm:$0x3] %vm61, %v60
    %s64 = scalar_lea.vmem %s1, 7
    %65 = vst.msk [vmem:[%s64] ss:$16 sm:$0xc] %vm61, %v60
    %v66 = vld [vmem:[#allocation0] sm:$0xf]
    %67 = vrot.lane.b32.xlu0 %v66, 120
    %v68 = vpop.permute.xlu0 %67
    %vm69 = vcmask 7168
    %s70 = scalar_lea.vmem %s1, 8
    %71 = vst.msk [vmem:[%s70] ss:$16 sm:$0x3] %vm69, %v68
    %s72 = scalar_lea.vmem %s1, 8
    %73 = vst.msk [vmem:[%s72] ss:$16 sm:$0xc] %vm69, %v68
    %v74 = vld [vmem:[#allocation0] sm:$0xf]
    %75 = vrot.lane.b32.xlu0 %v74, 119
    %v76 = vpop.permute.xlu0 %75
    %vm77 = vcmask 7168
    %s78 = scalar_lea.vmem %s1, 9
    %79 = vst.msk [vmem:[%s78] ss:$16 sm:$0x3] %vm77, %v76
    %s80 = scalar_lea.vmem %s1, 9
    %81 = vst.msk [vmem:[%s80] ss:$16 sm:$0xc] %vm77, %v76
    %v82 = vld [vmem:[#allocation0] sm:$0xf]
    %83 = vrot.lane.b32.xlu0 %v82, 118
    %v84 = vpop.permute.xlu0 %83
    %vm85 = vcmask 7168
    %s86 = scalar_lea.vmem %s1, 10
    %87 = vst.msk [vmem:[%s86] ss:$16 sm:$0x3] %vm85, %v84
    %s88 = scalar_lea.vmem %s1, 10
    %89 = vst.msk [vmem:[%s88] ss:$16 sm:$0xc] %vm85, %v84
    %v90 = vld [vmem:[#allocation0] sm:$0xf]
    %91 = vrot.lane.b32.xlu0 %v90, 117
    %v92 = vpop.permute.xlu0 %91
    %vm93 = vcmask 7168
    %s94 = scalar_lea.vmem %s1, 11
    %95 = vst.msk [vmem:[%s94] ss:$16 sm:$0x3] %vm93, %v92
    %s96 = scalar_lea.vmem %s1, 11
    %97 = vst.msk [vmem:[%s96] ss:$16 sm:$0xc] %vm93, %v92
    %v98 = vld [vmem:[#allocation0] sm:$0xf]
    %99 = vrot.lane.b32.xlu0 %v98, 116
    %v100 = vpop.permute.xlu0 %99
    %vm101 = vcmask 7168
    %s102 = scalar_lea.vmem %s1, 12
    %103 = vst.msk [vmem:[%s102] ss:$16 sm:$0x3] %vm101, %v100
    %s104 = scalar_lea.vmem %s1, 12
    %105 = vst.msk [vmem:[%s104] ss:$16 sm:$0xc] %vm101, %v100
    %v106 = vld [vmem:[#allocation0] sm:$0xf]
    %107 = vrot.lane.b32.xlu0 %v106, 115
    %v108 = vpop.permute.xlu0 %107
    %vm109 = vcmask 7168
    %s110 = scalar_lea.vmem %s1, 13
    %111 = vst.msk [vmem:[%s110] ss:$16 sm:$0x3] %vm109, %v108
    %s112 = scalar_lea.vmem %s1, 13
    %113 = vst.msk [vmem:[%s112] ss:$16 sm:$0xc] %vm109, %v108
    %v114 = vld [vmem:[#allocation0] sm:$0xf]
    %115 = vrot.lane.b32.xlu0 %v114, 114
    %v116 = vpop.permute.xlu0 %115
    %vm117 = vcmask 7168
    %s118 = scalar_lea.vmem %s1, 14
    %119 = vst.msk [vmem:[%s118] ss:$16 sm:$0x3] %vm117, %v116
    %s120 = scalar_lea.vmem %s1, 14
    %121 = vst.msk [vmem:[%s120] ss:$16 sm:$0xc] %vm117, %v116
    %v122 = vld [vmem:[#allocation0] sm:$0xf]
    %123 = vrot.lane.b32.xlu0 %v122, 113
    %v124 = vpop.permute.xlu0 %123
    %vm125 = vcmask 7168
    %s126 = scalar_lea.vmem %s1, 15
    %127 = vst.msk [vmem:[%s126] ss:$16 sm:$0x3] %vm125, %v124
    %s128 = scalar_lea.vmem %s1, 15
    %129 = vst.msk [vmem:[%s128] ss:$16 sm:$0xc] %vm125, %v124

// kernel: csph_decoding_layer_fwd.1
$region0: #{csph_decoding_layer_fwd.1}
  #allocation0 [shape = 'u32[]', space=smem, size = 0x4, offset = 0x4, fixed_abs, tag = 'smem constant byte address 0x4 - core index']
  #allocation1 [shape = 'u32[144,128]{1,0:T(1,128)}', space=vmem, size = 0x12000, scoped, tag = 'internal scratch']
  %s0 = inlined_call_operand.vmem [shape: f32[2,32,256], index: 0, kind: input, shape index: {}]
  %s1 = inlined_call_operand.vmem [shape: f32[64,32], index: 1, kind: input, shape index: {}]
  %s2 = inlined_call_operand.vmem [shape: f32[64,1], index: 2, kind: input, shape index: {}]
  %s3 = inlined_call_operand.vmem [shape: f32[256,64], index: 3, kind: input, shape index: {}]
  %s4 = inlined_call_operand.vmem [shape: f32[256,1], index: 4, kind: input, shape index: {}]
  %s5 = inlined_call_operand.vmem [shape: f32[2,256,256], index: 5, kind: output, shape index: {}]
  %s6 = sld [smem:[#allocation0]]
  $region53: #{csph_decoding_layer_fwd.1} parent=0
    _
  %s8 = ssub.s32 1, %s6
  %s9 = scalar_select 0, %s8, %s6
  loop: start=0, step=1, limit=4
  $region2: #{csph_decoding_layer_fwd.1} parent=0 // loop_pre_header
    _
  $region3: #{csph_decoding_layer_fwd.1} parent=0 // loop_header
    %s11 = sphi 0, %s15
    %p12 = scmp.ge.s32.totalorder %s11, 4
    %s18 = sphi 0, %s30
    %s19 = sphi 0, %s26
    %s20 = sphi 0, %s18
    %s21 = sphi 0, %s19
    %s22 = sphi 0, %s20
    %s23 = sphi 0, %s21
    %s35 = sphi 0, %s37
    %s38 = sphi 0, %s35
    %s39 = sphi 0, %s38
    %s55 = sphi 0, %s39
    %s59 = sphi 0, %s59
    %s61 = sphi 0, %s59
    %s62 = sphi 0, %s61
    %s76 = sphi 0, %s62
    %s80 = sphi 0, %s80
    %s82 = sphi 0, %s80
    %s83 = sphi 0, %s82
    %s97 = sphi 0, %s83
    %s101 = sphi 0, %s101
    %s103 = sphi 0, %s101
    %s104 = sphi 0, %s103
    %s118 = sphi 0, %s104
    %s122 = sphi 0, %s122
    %s124 = sphi 0, %s122
    %s125 = sphi 0, %s124
    %s139 = sphi 0, %s125
    %s147 = sphi 0, %s149
    %s150 = sphi 0, %s147
    %s151 = sphi 0, %s150
    %s167 = sphi 0, %s151
  $region4: #{csph_decoding_layer_fwd.1} parent=0 // loop_header_branch
    %14 = sbr.rel (%p12) target = $region8
  $region5: #{csph_decoding_layer_fwd.1} parent=0 // loop_body
    %s16 = ssub.s32 %s11, 1
    %s17 = ssub.s32 %s11, 2
    %s24 = sadd.s32 1, %s19
    %p25 = scmp.ge.s32.totalorder %s24, 1
    %s26 = scalar_select %p25, 0, %s24
    %s27 = sadd.s32 1, %s18
    %s28 = scalar_select %p25, %s27, %s18
    %p29 = scmp.ge.s32.totalorder %s28, 2
    %s30 = scalar_select %p29, 0, %s28
    %s31 = ssub.s32 %s18, %s30
    %s32 = ssub.s32 %s19, %s26
    %s33 = sor.u32 %s31, %s32
    %p34 = scmp.eq.s32.totalorder %s33, 0
    %s36 = sadd.s32 %s35, 1
    %s37 = scalar_select %p34, %s35, %s36
    %p40 = pneg %p34
    %p41 = scmp.eq.s32.totalorder %s11, 1
    %p42 = por %p40, %p41
    %p43 = scmp.ne.s32.totalorder %s35, %s38
    %p44 = scmp.eq.s32.totalorder %s11, 0
    %p45 = por %p43, %p44
    %p46 = scmp.ne.s32.totalorder %s35, %s38
    %p47 = scmp.eq.s32.totalorder %s16, 1
    %p48 = por %p46, %p47
    %p49 = scmp.ne.s32.totalorder %s38, %s39
    %p50 = scmp.eq.s32.totalorder %s16, 0
    %p51 = por %p49, %p50
    %p52 = scmp.ne.s32.totalorder %s38, %s39
    %p53 = scmp.eq.s32.totalorder %s17, 1
    %p54 = por %p52, %p53
    %p56 = scmp.ne.s32.totalorder %s39, %s55
    %p57 = scmp.eq.s32.totalorder %s17, 0
    %p58 = por %p56, %p57
    %s60 = sadd.s32 %s59, 1
    %p63 = scmp.eq.s32.totalorder %s11, 1
    %p64 = scmp.ne.s32.totalorder %s59, %s61
    %p65 = scmp.eq.s32.totalorder %s11, 0
    %p66 = por %p64, %p65
    %p67 = scmp.ne.s32.totalorder %s59, %s61
    %p68 = scmp.eq.s32.totalorder %s16, 1
    %p69 = por %p67, %p68
    %p70 = scmp.ne.s32.totalorder %s61, %s62
    %p71 = scmp.eq.s32.totalorder %s16, 0
    %p72 = por %p70, %p71
    %p73 = scmp.ne.s32.totalorder %s61, %s62
    %p74 = scmp.eq.s32.totalorder %s17, 1
    %p75 = por %p73, %p74
    %p77 = scmp.ne.s32.totalorder %s62, %s76
    %p78 = scmp.eq.s32.totalorder %s17, 0
    %p79 = por %p77, %p78
    %s81 = sadd.s32 %s80, 1
    %p84 = scmp.eq.s32.totalorder %s11, 1
    %p85 = scmp.ne.s32.totalorder %s80, %s82
    %p86 = scmp.eq.s32.totalorder %s11, 0
    %p87 = por %p85, %p86
    %p88 = scmp.ne.s32.totalorder %s80, %s82
    %p89 = scmp.eq.s32.totalorder %s16, 1
    %p90 = por %p88, %p89
    %p91 = scmp.ne.s32.totalorder %s82, %s83
    %p92 = scmp.eq.s32.totalorder %s16, 0
    %p93 = por %p91, %p92
    %p94 = scmp.ne.s32.totalorder %s82, %s83
    %p95 = scmp.eq.s32.totalorder %s17, 1
    %p96 = por %p94, %p95
    %p98 = scmp.ne.s32.totalorder %s83, %s97
    %p99 = scmp.eq.s32.totalorder %s17, 0
    %p100 = por %p98, %p99
    %s102 = sadd.s32 %s101, 1
    %p105 = scmp.eq.s32.totalorder %s11, 1
    %p106 = scmp.ne.s32.totalorder %s101, %s103
    %p107 = scmp.eq.s32.totalorder %s11, 0
    %p108 = por %p106, %p107
    %p109 = scmp.ne.s32.totalorder %s101, %s103
    %p110 = scmp.eq.s32.totalorder %s16, 1
    %p111 = por %p109, %p110
    %p112 = scmp.ne.s32.totalorder %s103, %s104
    %p113 = scmp.eq.s32.totalorder %s16, 0
    %p114 = por %p112, %p113
    %p115 = scmp.ne.s32.totalorder %s103, %s104
    %p116 = scmp.eq.s32.totalorder %s17, 1
    %p117 = por %p115, %p116
    %p119 = scmp.ne.s32.totalorder %s104, %s118
    %p120 = scmp.eq.s32.totalorder %s17, 0
    %p121 = por %p119, %p120
    %s123 = sadd.s32 %s122, 1
    %p126 = scmp.eq.s32.totalorder %s11, 1
    %p127 = scmp.ne.s32.totalorder %s122, %s124
    %p128 = scmp.eq.s32.totalorder %s11, 0
    %p129 = por %p127, %p128
    %p130 = scmp.ne.s32.totalorder %s122, %s124
    %p131 = scmp.eq.s32.totalorder %s16, 1
    %p132 = por %p130, %p131
    %p133 = scmp.ne.s32.totalorder %s124, %s125
    %p134 = scmp.eq.s32.totalorder %s16, 0
    %p135 = por %p133, %p134
    %p136 = scmp.ne.s32.totalorder %s124, %s125
    %p137 = scmp.eq.s32.totalorder %s17, 1
    %p138 = por %p136, %p137
    %p140 = scmp.ne.s32.totalorder %s125, %s139
    %p141 = scmp.eq.s32.totalorder %s17, 0
    %p142 = por %p140, %p141
    %s143 = ssub.s32 %s18, %s30
    %s144 = ssub.s32 %s19, %s26
    %s145 = sor.u32 %s143, %s144
    %p146 = scmp.eq.s32.totalorder %s145, 0
    %s148 = sadd.s32 %s147, 1
    %s149 = scalar_select %p146, %s147, %s148
    %p152 = pneg %p146
    %p153 = scmp.eq.s32.totalorder %s11, 1
    %p154 = por %p152, %p153
    %p155 = scmp.ne.s32.totalorder %s147, %s150
    %p156 = scmp.eq.s32.totalorder %s11, 0
    %p157 = por %p155, %p156
    %p158 = scmp.ne.s32.totalorder %s147, %s150
    %p159 = scmp.eq.s32.totalorder %s16, 1
    %p160 = por %p158, %p159
    %p161 = scmp.ne.s32.totalorder %s150, %s151
    %p162 = scmp.eq.s32.totalorder %s16, 0
    %p163 = por %p161, %p162
    %p164 = scmp.ne.s32.totalorder %s150, %s151
    %p165 = scmp.eq.s32.totalorder %s17, 1
    %p166 = por %p164, %p165
    %p168 = scmp.ne.s32.totalorder %s151, %s167
    %p169 = scmp.eq.s32.totalorder %s17, 0
    %p170 = por %p168, %p169
    %p171 = scmp.le.s32.totalorder 1, %s11
    %p172 = scmp.lt.s32.totalorder %s11, 3
    %p173 = pnand %p171, %p172
    %p174 = pneg %p173
    // Predicated region
    $region9: #{csph_decoding_layer_fwd.1} parent=5 // pred_check
      _
    $region10: #{csph_decoding_layer_fwd.1} parent=5 // pred_check_branch
      %176 = sbr.rel (%p173) target = $region12
    $region11: #{csph_decoding_layer_fwd.1} parent=5 // pred_region
      %s177 = ssub.s32 %s11, 1
      // Predicated region
      $region13: #{csph_decoding_layer_fwd.1} parent=11 // pred_check
        %p178 = pneg %p72
      $region14: #{csph_decoding_layer_fwd.1} parent=11 // pred_check_branch
        %180 = sbr.rel (%p178) target = $region16
      $region15: #{csph_decoding_layer_fwd.1} parent=11 // pred_region
        _
      $region16: #{csph_decoding_layer_fwd.1} parent=11 // pred_fallthru
        _
      // Predicated region
      $region17: #{csph_decoding_layer_fwd.1} parent=11 // pred_check
        %p181 = pneg %p93
      $region18: #{csph_decoding_layer_fwd.1} parent=11 // pred_check_branch
        %183 = sbr.rel (%p181) target = $region20
      $region19: #{csph_decoding_layer_fwd.1} parent=11 // pred_region
        _
      $region20: #{csph_decoding_layer_fwd.1} parent=11 // pred_fallthru
        _
      // Predicated region
      $region21: #{csph_decoding_layer_fwd.1} parent=11 // pred_check
        %p184 = pneg %p114
      $region22: #{csph_decoding_layer_fwd.1} parent=11 // pred_check_branch
        %186 = sbr.rel (%p184) target = $region24
      $region23: #{csph_decoding_layer_fwd.1} parent=11 // pred_region
        _
      $region24: #{csph_decoding_layer_fwd.1} parent=11 // pred_fallthru
        _
      // Predicated region
      $region25: #{csph_decoding_layer_fwd.1} parent=11 // pred_check
        %p187 = pneg %p135
      $region26: #{csph_decoding_layer_fwd.1} parent=11 // pred_check_branch
        %189 = sbr.rel (%p187) target = $region28
      $region27: #{csph_decoding_layer_fwd.1} parent=11 // pred_region
        _
      $region28: #{csph_decoding_layer_fwd.1} parent=11 // pred_fallthru
        _
    $region12: #{csph_decoding_layer_fwd.1} parent=5 // pred_fallthru
      _
    %p190 = scmp.lt.s32.totalorder %s11, 2
    // Predicated region
    $region29: #{csph_decoding_layer_fwd.1} parent=5 // pred_check
      %p191 = pneg %p190
    $region30: #{csph_decoding_layer_fwd.1} parent=5 // pred_check_branch
      %193 = sbr.rel (%p191) target = $region32
    $region31: #{csph_decoding_layer_fwd.1} parent=5 // pred_region
      // Predicated region
      $region33: #{csph_decoding_layer_fwd.1} parent=31 // pred_check
        %p194 = pneg %p45
      $region34: #{csph_decoding_layer_fwd.1} parent=31 // pred_check_branch
        %196 = sbr.rel (%p194) target = $region36
      $region35: #{csph_decoding_layer_fwd.1} parent=31 // pred_region
        %s197 = smul.u32 2, %s19
        %p198 = scmp.lt.s32.totalorder %s18, 1
        %s199 = scalar_select %p198, %s18, 1
        %p200 = scmp.lt.s32.totalorder %s197, 1
        %s201 = scalar_select %p200, %s197, 1
        %s202 = smul.addr %s199, 8
        %s203 = sadd.s32 %s201, %s202
        %s204 = smul.addr %s203, 8
        %s205 = scalar_lea.vmem %s0, %s204
        %s206 = smul.u32 2, %s19
      $region36: #{csph_decoding_layer_fwd.1} parent=31 // pred_fallthru
        _
    $region32: #{csph_decoding_layer_fwd.1} parent=5 // pred_fallthru
      _
    %p207 = scmp.le.s32.totalorder 1, %s11
    %p208 = scmp.lt.s32.totalorder %s11, 3
    %p209 = pnand %p207, %p208
    %p210 = pneg %p209
    // Predicated region
    $region37: #{csph_decoding_layer_fwd.1} parent=5 // pred_check
      _
    $region38: #{csph_decoding_layer_fwd.1} parent=5 // pred_check_branch
      %212 = sbr.rel (%p209) target = $region40
    $region39: #{csph_decoding_layer_fwd.1} parent=5 // pred_region
      %s213 = ssub.s32 %s11, 1
      %s214 = smul.u32 2, %s21
      %p215 = scmp.lt.s32.totalorder %s20, 1
      %s216 = scalar_select %p215, %s20, 1
      %p217 = scmp.lt.s32.totalorder %s214, 1
      %s218 = scalar_select %p217, %s214, 1
      %s219 = smul.addr %s216, 8
      %s220 = sadd.s32 %s218, %s219
      %s221 = smul.addr %s220, 8
      %s222 = scalar_lea.vmem %s0, %s221
      %p223 = pneg %p51
      %p224 = pneg %p48
      %p225 = pneg %p72
      %p226 = pneg %p69
      %p227 = pneg %p93
      %p228 = pneg %p90
      %p229 = pneg %p114
      %p230 = pneg %p111
      %p231 = pneg %p135
      %p232 = pneg %p132
      %p233 = pneg %p163
      %p234 = pneg %p160
      %s235 = smul.u32 2, %s21
      %p236 = scmp.lt.s32.totalorder %s20, 1
      %s237 = scalar_select %p236, %s20, 1
      %p238 = scmp.lt.s32.totalorder %s235, 1
      %s239 = scalar_select %p238, %s235, 1
      %s240 = smul.addr %s237, 64
      %s241 = sadd.s32 %s239, %s240
      %s242 = smul.addr %s241, 8
      %s243 = scalar_lea.vmem %s5, %s242
      %s244 = smul.u32 2, %s21
      %p245 = scmp.lt.s32.totalorder %s20, 1
      %s246 = scalar_select %p245, %s20, 1
      %p247 = scmp.lt.s32.totalorder %s244, 1
      %s248 = scalar_select %p247, %s244, 1
      %s249 = smul.addr %s246, 8
      %s250 = sadd.s32 %s248, %s249
      %s251 = smul.addr %s250, 8
      %s252 = scalar_lea.vmem %s0, %s251
      %s253 = smul.u32 2, %s21
      %s254 = smul.u32 2, %s21
      %p255 = scmp.lt.s32.totalorder %s20, 1
      %s256 = scalar_select %p255, %s20, 1
      %p257 = scmp.lt.s32.totalorder %s254, 1
      %s258 = scalar_select %p257, %s254, 1
      %s259 = smul.addr %s256, 64
      %s260 = sadd.s32 %s258, %s259
      %s261 = smul.addr %s260, 8
      %s262 = scalar_lea.vmem %s5, %s261
      %s263 = smul.u32 2, %s21
      %v264 = vld [vmem:[%s252] sm:$0xff]
      %v265 = vld [vmem:[%s252 + $0x8] sm:$0xff]
      %v266 = vld [vmem:[%s252 + $0x10] sm:$0xff]
      %v267 = vld [vmem:[%s252 + $0x18] sm:$0xff]
      %v268 = vld [vmem:[%s252 + $0x20] sm:$0xff]
      %v269 = vld [vmem:[%s252 + $0x28] sm:$0xff]
      %v270 = vld [vmem:[%s252 + $0x30] sm:$0xff]
      %v271 = vld [vmem:[%s252 + $0x38] sm:$0xff]
      %v272 = vld [vmem:[%s1] sm:$0xff]
      %v273 = vld [vmem:[%s1 + $0x8] sm:$0xff]
      %v274 = vld [vmem:[%s1 + $0x10] sm:$0xff]
      %v275 = vld [vmem:[%s1 + $0x18] sm:$0xff]
      %v276 = vld [vmem:[%s1 + $0x20] sm:$0xff]
      %v277 = vld [vmem:[%s1 + $0x28] sm:$0xff]
      %v278 = vld [vmem:[%s1 + $0x30] sm:$0xff]
      %v279 = vld [vmem:[%s1 + $0x38] sm:$0xff]
      %v280 = vld [vmem:[%s2] sm:$0xff]
      %v281 = vld [vmem:[%s2 + $0x8] sm:$0xff]
      %v282 = vld [vmem:[%s2 + $0x10] sm:$0xff]
      %v283 = vld [vmem:[%s2 + $0x18] sm:$0xff]
      %v284 = vld [vmem:[%s2 + $0x20] sm:$0xff]
      %v285 = vld [vmem:[%s2 + $0x28] sm:$0xff]
      %v286 = vld [vmem:[%s2 + $0x30] sm:$0xff]
      %v287 = vld [vmem:[%s2 + $0x38] sm:$0xff]
      %289 = vset.pattern.permute.xlu0 0
      %290 = vperm.xlu0 %289, %v280
      %v291 = vpop.permute.xlu0 %290
      %294 = vset.pattern.permute.xlu0 0
      %295 = vperm.xlu0 %294, %v281
      %v296 = vpop.permute.xlu0 %295
      %299 = vset.pattern.permute.xlu0 0
      %300 = vperm.xlu0 %299, %v282
      %v301 = vpop.permute.xlu0 %300
      %304 = vset.pattern.permute.xlu0 0
      %305 = vperm.xlu0 %304, %v283
      %v306 = vpop.permute.xlu0 %305
      %309 = vset.pattern.permute.xlu0 0
      %310 = vperm.xlu0 %309, %v284
      %v311 = vpop.permute.xlu0 %310
      %314 = vset.pattern.permute.xlu0 0
      %315 = vperm.xlu0 %314, %v285
      %v316 = vpop.permute.xlu0 %315
      %319 = vset.pattern.permute.xlu0 0
      %320 = vperm.xlu0 %319, %v286
      %v321 = vpop.permute.xlu0 %320
      %324 = vset.pattern.permute.xlu0 0
      %325 = vperm.xlu0 %324, %v287
      %v326 = vpop.permute.xlu0 %325
      %vm328 = vcmask 261120
      %v330 = vsel %vm328, %v272, 0
      %v333 = vsel %vm328, %v273, 0
      %v336 = vsel %vm328, %v274, 0
      %v339 = vsel %vm328, %v275, 0
      %v342 = vsel %vm328, %v276, 0
      %v345 = vsel %vm328, %v277, 0
      %v348 = vsel %vm328, %v278, 0
      %v351 = vsel %vm328, %v279, 0
      %353 = vmatprep.subr.mxu0 %v265
      %354 = vmatpush1.msra.mxu0 %v264
      %355 = vmatprep.subr.mxu0 %v267
      %356 = vmatpush1.msra.mxu0 %v266
      %357 = vmatprep.subr.mxu0 %v269
      %358 = vmatpush1.msra.mxu0 %v268
      %359 = vmatprep.subr.mxu0 %v271
      %360 = vmatpush1.msra.mxu0 %v270
      %361 = vmatprep.subr.mxu0 0.0
      %362 = vmatpush1.msra.mxu0 0.0
      %363 = vmatprep.subr.mxu0 0.0
      %364 = vmatpush1.msra.mxu0 0.0
      %365 = vmatprep.subr.mxu0 0.0
      %366 = vmatpush1.msra.mxu0 0.0
      %367 = vmatprep.subr.mxu0 0.0
      %368 = vmatpush1.msra.mxu0 0.0
      %369 = vmatprep.subr.mxu0 0.0
      %370 = vmatpush1.msra.mxu0 0.0
      %371 = vmatprep.subr.mxu0 0.0
      %372 = vmatpush1.msra.mxu0 0.0
      %373 = vmatprep.subr.mxu0 0.0
      %374 = vmatpush1.msra.mxu0 0.0
      %375 = vmatprep.subr.mxu0 0.0
      %376 = vmatpush1.msra.mxu0 0.0
      %377 = vmatprep.subr.mxu0 0.0
      %378 = vmatpush1.msra.mxu0 0.0
      %379 = vmatprep.subr.mxu0 0.0
      %380 = vmatpush1.msra.mxu0 0.0
      %381 = vmatprep.subr.mxu0 0.0
      %382 = vmatpush1.msra.mxu0 0.0
      %383 = vmatprep.subr.mxu0 0.0
      %384 = vmatpush1.msra.mxu0 0.0
      %385 = vmatprep.subr.mxu0 0.0
      %386 = vmatpush1.msra.mxu0 0.0
      %387 = vmatprep.subr.mxu0 0.0
      %388 = vmatpush1.msra.mxu0 0.0
      %389 = vmatprep.subr.mxu0 0.0
      %390 = vmatpush1.msra.mxu0 0.0
      %391 = vmatprep.subr.mxu0 0.0
      %392 = vmatpush1.msra.mxu0 0.0
      %393 = vmatprep.subr.mxu0 0.0
      %394 = vmatpush1.msra.mxu0 0.0
      %395 = vmatprep.subr.mxu0 0.0
      %396 = vmatpush1.msra.mxu0 0.0
      %397 = vmatprep.subr.mxu0 0.0
      %398 = vmatpush1.msra.mxu0 0.0
      %399 = vmatprep.subr.mxu0 0.0
      %400 = vmatpush1.msra.mxu0 0.0
      %401 = vmatprep.subr.mxu0 0.0
      %402 = vmatpush1.msra.mxu0 0.0
      %403 = vmatprep.subr.mxu0 0.0
      %404 = vmatpush1.msra.mxu0 0.0
      %405 = vmatprep.subr.mxu0 0.0
      %406 = vmatpush1.msra.mxu0 0.0
      %407 = vmatprep.subr.mxu0 0.0
      %408 = vmatpush1.msra.mxu0 0.0
      %409 = vmatprep.subr.mxu0 0.0
      %410 = vmatpush1.msra.mxu0 0.0
      %411 = vmatprep.subr.mxu0 0.0
      %412 = vmatpush1.msra.mxu0 0.0
      %413 = vmatprep.subr.mxu0 0.0
      %414 = vmatpush1.msra.mxu0 0.0
      %415 = vmatprep.subr.mxu0 0.0
      %416 = vmatpush1.msra.mxu0 0.0
      %417 = vmatprep.mubr.f32.mxu0 0.0
      %418 = vmatmul.mubr.f32.gmra.mrb[0].mxu0 %v330
      %v419 = vpop.f32.mrb[0].mxu0
      %v420 = vadd.f32 %v291, %v419
      %v421 = vpop.f32.mrb[0].mxu0
      %v422 = vadd.f32 %v291, %v421
      %423 = vmatprep.mubr.f32.mxu0 0.0
      %424 = vmatmul.mubr.f32.gmra.mrb[0].mxu0 %v333
      %v425 = vpop.f32.mrb[0].mxu0
      %v426 = vadd.f32 %v296, %v425
      %v427 = vpop.f32.mrb[0].mxu0
      %v428 = vadd.f32 %v296, %v427
      %429 = vmatprep.mubr.f32.mxu0 0.0
      %430 = vmatmul.mubr.f32.gmra.mrb[0].mxu0 %v336
      %v431 = vpop.f32.mrb[0].mxu0
      %v432 = vadd.f32 %v301, %v431
      %v433 = vpop.f32.mrb[0].mxu0
      %v434 = vadd.f32 %v301, %v433
      %435 = vmatprep.mubr.f32.mxu0 0.0
      %436 = vmatmul.mubr.f32.gmra.mrb[0].mxu0 %v339
      %v437 = vpop.f32.mrb[0].mxu0
      %v438 = vadd.f32 %v306, %v437
      %v439 = vpop.f32.mrb[0].mxu0
      %v440 = vadd.f32 %v306, %v439
      %441 = vmatprep.mubr.f32.mxu0 0.0
      %442 = vmatmul.mubr.f32.gmra.mrb[0].mxu0 %v342
      %v443 = vpop.f32.mrb[0].mxu0
      %v444 = vadd.f32 %v311, %v443
      %v445 = vpop.f32.mrb[0].mxu0
      %v446 = vadd.f32 %v311, %v445
      %447 = vmatprep.mubr.f32.mxu0 0.0
      %448 = vmatmul.mubr.f32.gmra.mrb[0].mxu0 %v345
      %v449 = vpop.f32.mrb[0].mxu0
      %v450 = vadd.f32 %v316, %v449
      %v451 = vpop.f32.mrb[0].mxu0
      %v452 = vadd.f32 %v316, %v451
      %453 = vmatprep.mubr.f32.mxu0 0.0
      %454 = vmatmul.mubr.f32.gmra.mrb[0].mxu0 %v348
      %v455 = vpop.f32.mrb[0].mxu0
      %v456 = vadd.f32 %v321, %v455
      %v457 = vpop.f32.mrb[0].mxu0
      %v458 = vadd.f32 %v321, %v457
      %459 = vmatprep.mubr.f32.mxu0 0.0
      %460 = vmatmul.mubr.f32.gmra.mrb[0].mxu0 %v351
      %v461 = vpop.f32.mrb[0].mxu0
      %v462 = vadd.f32 %v326, %v461
      %v463 = vpop.f32.mrb[0].mxu0
      %v464 = vadd.f32 %v326, %v463
      %465 = vdwg.mxu0
      %v466 = vmax.f32 %v420, 0.0
      %v467 = vmax.f32 %v422, 0.0
      %v468 = vmax.f32 %v426, 0.0
      %v469 = vmax.f32 %v428, 0.0
      %v470 = vmax.f32 %v432, 0.0
      %v471 = vmax.f32 %v434, 0.0
      %v472 = vmax.f32 %v438, 0.0
      %v473 = vmax.f32 %v440, 0.0
      %v474 = vmax.f32 %v444, 0.0
      %v475 = vmax.f32 %v446, 0.0
      %v476 = vmax.f32 %v450, 0.0
      %v477 = vmax.f32 %v452, 0.0
      %v478 = vmax.f32 %v456, 0.0
      %v479 = vmax.f32 %v458, 0.0
      %v480 = vmax.f32 %v462, 0.0
      %v481 = vmax.f32 %v464, 0.0
      %v482 = vld [vmem:[%s3] sm:$0xff]
      %v483 = vld [vmem:[%s3 + $0x8] sm:$0xff]
      %v484 = vld [vmem:[%s3 + $0x10] sm:$0xff]
      %v485 = vld [vmem:[%s3 + $0x18] sm:$0xff]
      %v486 = vld [vmem:[%s3 + $0x20] sm:$0xff]
      %v487 = vld [vmem:[%s3 + $0x28] sm:$0xff]
      %v488 = vld [vmem:[%s3 + $0x30] sm:$0xff]
      %v489 = vld [vmem:[%s3 + $0x38] sm:$0xff]
      %v490 = vld [vmem:[%s3 + $0x40] sm:$0xff]
      %v491 = vld [vmem:[%s3 + $0x48] sm:$0xff]
      %v492 = vld [vmem:[%s3 + $0x50] sm:$0xff]
      %v493 = vld [vmem:[%s3 + $0x58] sm:$0xff]
      %v494 = vld [vmem:[%s3 + $0x60] sm:$0xff]
      %v495 = vld [vmem:[%s3 + $0x68] sm:$0xff]
      %v496 = vld [vmem:[%s3 + $0x70] sm:$0xff]
      %v497 = vld [vmem:[%s3 + $0x78] sm:$0xff]
      %v498 = vld [vmem:[%s3 + $0x80] sm:$0xff]
      %v499 = vld [vmem:[%s3 + $0x88] sm:$0xff]
      %v500 = vld [vmem:[%s3 + $0x90] sm:$0xff]
      %v501 = vld [vmem:[%s3 + $0x98] sm:$0xff]
      %v502 = vld [vmem:[%s3 + $0xa0] sm:$0xff]
      %v503 = vld [vmem:[%s3 + $0xa8] sm:$0xff]
      %v504 = vld [vmem:[%s3 + $0xb0] sm:$0xff]
      %v505 = vld [vmem:[%s3 + $0xb8] sm:$0xff]
      %v506 = vld [vmem:[%s3 + $0xc0] sm:$0xff]
      %v507 = vld [vmem:[%s3 + $0xc8] sm:$0xff]
      %v508 = vld [vmem:[%s3 + $0xd0] sm:$0xff]
      %v509 = vld [vmem:[%s3 + $0xd8] sm:$0xff]
      %v510 = vld [vmem:[%s3 + $0xe0] sm:$0xff]
      %v511 = vld [vmem:[%s3 + $0xe8] sm:$0xff]
      %v512 = vld [vmem:[%s3 + $0xf0] sm:$0xff]
      %v513 = vld [vmem:[%s3 + $0xf8] sm:$0xff]
      %v514 = vld [vmem:[%s4] sm:$0xff]
      %v515 = vld [vmem:[%s4 + $0x8] sm:$0xff]
      %v516 = vld [vmem:[%s4 + $0x10] sm:$0xff]
      %v517 = vld [vmem:[%s4 + $0x18] sm:$0xff]
      %v518 = vld [vmem:[%s4 + $0x20] sm:$0xff]
      %v519 = vld [vmem:[%s4 + $0x28] sm:$0xff]
      %v520 = vld [vmem:[%s4 + $0x30] sm:$0xff]
      %v521 = vld [vmem:[%s4 + $0x38] sm:$0xff]
      %v522 = vld [vmem:[%s4 + $0x40] sm:$0xff]
      %v523 = vld [vmem:[%s4 + $0x48] sm:$0xff]
      %v524 = vld [vmem:[%s4 + $0x50] sm:$0xff]
      %v525 = vld [vmem:[%s4 + $0x58] sm:$0xff]
      %v526 = vld [vmem:[%s4 + $0x60] sm:$0xff]
      %v527 = vld [vmem:[%s4 + $0x68] sm:$0xff]
      %v528 = vld [vmem:[%s4 + $0x70] sm:$0xff]
      %v529 = vld [vmem:[%s4 + $0x78] sm:$0xff]
      %v530 = vld [vmem:[%s4 + $0x80] sm:$0xff]
      %v531 = vld [vmem:[%s4 + $0x88] sm:$0xff]
      %v532 = vld [vmem:[%s4 + $0x90] sm:$0xff]
      %v533 = vld [vmem:[%s4 + $0x98] sm:$0xff]
      %v534 = vld [vmem:[%s4 + $0xa0] sm:$0xff]
      %v535 = vld [vmem:[%s4 + $0xa8] sm:$0xff]
      %v536 = vld [vmem:[%s4 + $0xb0] sm:$0xff]
      %v537 = vld [vmem:[%s4 + $0xb8] sm:$0xff]
      %v538 = vld [vmem:[%s4 + $0xc0] sm:$0xff]
      %v539 = vld [vmem:[%s4 + $0xc8] sm:$0xff]
      %v540 = vld [vmem:[%s4 + $0xd0] sm:$0xff]
      %v541 = vld [vmem:[%s4 + $0xd8] sm:$0xff]
      %v542 = vld [vmem:[%s4 + $0xe0] sm:$0xff]
      %v543 = vld [vmem:[%s4 + $0xe8] sm:$0xff]
      %v544 = vld [vmem:[%s4 + $0xf0] sm:$0xff]
      %v545 = vld [vmem:[%s4 + $0xf8] sm:$0xff]
      %547 = vset.pattern.permute.xlu0 0
      %548 = vperm.xlu0 %547, %v514
      %v549 = vpop.permute.xlu0 %548
      %552 = vset.pattern.permute.xlu0 0
      %553 = vperm.xlu0 %552, %v515
      %v554 = vpop.permute.xlu0 %553
      %557 = vset.pattern.permute.xlu0 0
      %558 = vperm.xlu0 %557, %v516
      %v559 = vpop.permute.xlu0 %558
      %562 = vset.pattern.permute.xlu0 0
      %563 = vperm.xlu0 %562, %v517
      %v564 = vpop.permute.xlu0 %563
      %567 = vset.pattern.permute.xlu0 0
      %568 = vperm.xlu0 %567, %v518
      %v569 = vpop.permute.xlu0 %568
      %572 = vset.pattern.permute.xlu0 0
      %573 = vperm.xlu0 %572, %v519
      %v574 = vpop.permute.xlu0 %573
      %577 = vset.pattern.permute.xlu0 0
      %578 = vperm.xlu0 %577, %v520
      %v579 = vpop.permute.xlu0 %578
      %582 = vset.pattern.permute.xlu0 0
      %583 = vperm.xlu0 %582, %v521
      %v584 = vpop.permute.xlu0 %583
      %587 = vset.pattern.permute.xlu0 0
      %588 = vperm.xlu0 %587, %v522
      %v589 = vpop.permute.xlu0 %588
      %592 = vset.pattern.permute.xlu0 0
      %593 = vperm.xlu0 %592, %v523
      %v594 = vpop.permute.xlu0 %593
      %597 = vset.pattern.permute.xlu0 0
      %598 = vperm.xlu0 %597, %v524
      %v599 = vpop.permute.xlu0 %598
      %602 = vset.pattern.permute.xlu0 0
      %603 = vperm.xlu0 %602, %v525
      %v604 = vpop.permute.xlu0 %603
      %607 = vset.pattern.permute.xlu0 0
      %608 = vperm.xlu0 %607, %v526
      %v609 = vpop.permute.xlu0 %608
      %612 = vset.pattern.permute.xlu0 0
      %613 = vperm.xlu0 %612, %v527
      %v614 = vpop.permute.xlu0 %613
      %617 = vset.pattern.permute.xlu0 0
      %618 = vperm.xlu0 %617, %v528
      %v619 = vpop.permute.xlu0 %618
      %622 = vset.pattern.permute.xlu0 0
      %623 = vperm.xlu0 %622, %v529
      %v624 = vpop.permute.xlu0 %623
      %627 = vset.pattern.permute.xlu0 0
      %628 = vperm.xlu0 %627, %v530
      %v629 = vpop.permute.xlu0 %628
      %632 = vset.pattern.permute.xlu0 0
      %633 = vperm.xlu0 %632, %v531
      %v634 = vpop.permute.xlu0 %633
      %637 = vset.pattern.permute.xlu0 0
      %638 = vperm.xlu0 %637, %v532
      %v639 = vpop.permute.xlu0 %638
      %642 = vset.pattern.permute.xlu0 0
      %643 = vperm.xlu0 %642, %v533
      %v644 = vpop.permute.xlu0 %643
      %647 = vset.pattern.permute.xlu0 0
      %648 = vperm.xlu0 %647, %v534
      %v649 = vpop.permute.xlu0 %648
      %652 = vset.pattern.permute.xlu0 0
      %653 = vperm.xlu0 %652, %v535
      %v654 = vpop.permute.xlu0 %653
      %657 = vset.pattern.permute.xlu0 0
      %658 = vperm.xlu0 %657, %v536
      %v659 = vpop.permute.xlu0 %658
      %662 = vset.pattern.permute.xlu0 0
      %663 = vperm.xlu0 %662, %v537
      %v664 = vpop.permute.xlu0 %663
      %667 = vset.pattern.permute.xlu0 0
      %668 = vperm.xlu0 %667, %v538
      %v669 = vpop.permute.xlu0 %668
      %672 = vset.pattern.permute.xlu0 0
      %673 = vperm.xlu0 %672, %v539
      %v674 = vpop.permute.xlu0 %673
      %677 = vset.pattern.permute.xlu0 0
      %678 = vperm.xlu0 %677, %v540
      %v679 = vpop.permute.xlu0 %678
      %682 = vset.pattern.permute.xlu0 0
      %683 = vperm.xlu0 %682, %v541
      %v684 = vpop.permute.xlu0 %683
      %687 = vset.pattern.permute.xlu0 0
      %688 = vperm.xlu0 %687, %v542
      %v689 = vpop.permute.xlu0 %688
      %692 = vset.pattern.permute.xlu0 0
      %693 = vperm.xlu0 %692, %v543
      %v694 = vpop.permute.xlu0 %693
      %697 = vset.pattern.permute.xlu0 0
      %698 = vperm.xlu0 %697, %v544
      %v699 = vpop.permute.xlu0 %698
      %702 = vset.pattern.permute.xlu0 0
      %703 = vperm.xlu0 %702, %v545
      %v704 = vpop.permute.xlu0 %703
      %vm706 = vcmask 523264
      %v708 = vsel %vm706, %v482, 0
      %v711 = vsel %vm706, %v483, 0
      %v714 = vsel %vm706, %v484, 0
      %v717 = vsel %vm706, %v485, 0
      %v720 = vsel %vm706, %v486, 0
      %v723 = vsel %vm706, %v487, 0
      %v726 = vsel %vm706, %v488, 0
      %v729 = vsel %vm706, %v489, 0
      %v732 = vsel %vm706, %v490, 0
      %v735 = vsel %vm706, %v491, 0
      %v738 = vsel %vm706, %v492, 0
      %v741 = vsel %vm706, %v493, 0
      %v744 = vsel %vm706, %v494, 0
      %v747 = vsel %vm706, %v495, 0
      %v750 = vsel %vm706, %v496, 0
      %v753 = vsel %vm706, %v497, 0
      %v756 = vsel %vm706, %v498, 0
      %v759 = vsel %vm706, %v499, 0
      %v762 = vsel %vm706, %v500, 0
      %v765 = vsel %vm706, %v501, 0
      %v768 = vsel %vm706, %v502, 0
      %v771 = vsel %vm706, %v503, 0
      %v774 = vsel %vm706, %v504, 0
      %v777 = vsel %vm706, %v505, 0
      %v780 = vsel %vm706, %v506, 0
      %v783 = vsel %vm706, %v507, 0
      %v786 = vsel %vm706, %v508, 0
      %v789 = vsel %vm706, %v509, 0
      %v792 = vsel %vm706, %v510, 0
      %v795 = vsel %vm706, %v511, 0
      %v798 = vsel %vm706, %v512, 0
      %v801 = vsel %vm706, %v513, 0
      %803 = vmatprep.subr.mxu0 %v467
      %804 = vmatpush1.msra.mxu0 %v466
      %805 = vmatprep.subr.mxu0 %v469
      %806 = vmatpush1.msra.mxu0 %v468
      %807 = vmatprep.subr.mxu0 %v471
      %808 = vmatpush1.msra.mxu0 %v470
      %809 = vmatprep.subr.mxu0 %v473
      %810 = vmatpush1.msra.mxu0 %v472
      %811 = vmatprep.subr.mxu0 %v475
      %812 = vmatpush1.msra.mxu0 %v474
      %813 = vmatprep.subr.mxu0 %v477
      %814 = vmatpush1.msra.mxu0 %v476
      %815 = vmatprep.subr.mxu0 %v479
      %816 = vmatpush1.msra.mxu0 %v478
      %817 = vmatprep.subr.mxu0 %v481
      %818 = vmatpush1.msra.mxu0 %v480
      %819 = vmatprep.subr.mxu0 0.0
      %820 = vmatpush1.msra.mxu0 0.0
      %821 = vmatprep.subr.mxu0 0.0
      %822 = vmatpush1.msra.mxu0 0.0
      %823 = vmatprep.subr.mxu0 0.0
      %824 = vmatpush1.msra.mxu0 0.0
      %825 = vmatprep.subr.mxu0 0.0
      %826 = vmatpush1.msra.mxu0 0.0
      %827 = vmatprep.subr.mxu0 0.0
      %828 = vmatpush1.msra.mxu0 0.0
      %829 = vmatprep.subr.mxu0 0.0
      %830 = vmatpush1.msra.mxu0 0.0
      %831 = vmatprep.subr.mxu0 0.0
      %832 = vmatpush1.msra.mxu0 0.0
      %833 = vmatprep.subr.mxu0 0.0
      %834 = vmatpush1.msra.mxu0 0.0
      %835 = vmatprep.subr.mxu0 0.0
      %836 = vmatpush1.msra.mxu0 0.0
      %837 = vmatprep.subr.mxu0 0.0
      %838 = vmatpush1.msra.mxu0 0.0
      %839 = vmatprep.subr.mxu0 0.0
      %840 = vmatpush1.msra.mxu0 0.0
      %841 = vmatprep.subr.mxu0 0.0
      %842 = vmatpush1.msra.mxu0 0.0
      %843 = vmatprep.subr.mxu0 0.0
      %844 = vmatpush1.msra.mxu0 0.0
      %845 = vmatprep.subr.mxu0 0.0
      %846 = vmatpush1.msra.mxu0 0.0
      %847 = vmatprep.subr.mxu0 0.0
      %848 = vmatpush1.msra.mxu0 0.0
      %849 = vmatprep.subr.mxu0 0.0
      %850 = vmatpush1.msra.mxu0 0.0
      %851 = vmatprep.subr.mxu0 0.0
      %852 = vmatpush1.msra.mxu0 0.0
      %853 = vmatprep.subr.mxu0 0.0
      %854 = vmatpush1.msra.mxu0 0.0
      %855 = vmatprep.subr.mxu0 0.0
      %856 = vmatpush1.msra.mxu0 0.0
      %857 = vmatprep.subr.mxu0 0.0
      %858 = vmatpush1.msra.mxu0 0.0
      %859 = vmatprep.subr.mxu0 0.0
      %860 = vmatpush1.msra.mxu0 0.0
      %861 = vmatprep.subr.mxu0 0.0
      %862 = vmatpush1.msra.mxu0 0.0
      %863 = vmatprep.subr.mxu0 0.0
      %864 = vmatpush1.msra.mxu0 0.0
      %865 = vmatprep.subr.mxu0 0.0
      %866 = vmatpush1.msra.mxu0 0.0
      %867 = vmatprep.mubr.f32.mxu0 0.0
      %868 = vmatmul.mubr.f32.gmra.mrb[0].mxu0 %v708
      %v869 = vpop.f32.mrb[0].mxu0
      %v870 = vadd.f32 %v549, %v869
      %v871 = vpop.f32.mrb[0].mxu0
      %v872 = vadd.f32 %v549, %v871
      %873 = vmatprep.mubr.f32.mxu0 0.0
      %874 = vmatmul.mubr.f32.gmra.mrb[0].mxu0 %v711
      %v875 = vpop.f32.mrb[0].mxu0
      %v876 = vadd.f32 %v554, %v875
      %v877 = vpop.f32.mrb[0].mxu0
      %v878 = vadd.f32 %v554, %v877
      %879 = vmatprep.mubr.f32.mxu0 0.0
      %880 = vmatmul.mubr.f32.gmra.mrb[0].mxu0 %v714
      %v881 = vpop.f32.mrb[0].mxu0
      %v882 = vadd.f32 %v559, %v881
      %v883 = vpop.f32.mrb[0].mxu0
      %v884 = vadd.f32 %v559, %v883
      %885 = vmatprep.mubr.f32.mxu0 0.0
      %886 = vmatmul.mubr.f32.gmra.mrb[0].mxu0 %v717
      %v887 = vpop.f32.mrb[0].mxu0
      %v888 = vadd.f32 %v564, %v887
      %v889 = vpop.f32.mrb[0].mxu0
      %v890 = vadd.f32 %v564, %v889
      %891 = vmatprep.mubr.f32.mxu0 0.0
      %892 = vmatmul.mubr.f32.gmra.mrb[0].mxu0 %v720
      %v893 = vpop.f32.mrb[0].mxu0
      %v894 = vadd.f32 %v569, %v893
      %v895 = vpop.f32.mrb[0].mxu0
      %v896 = vadd.f32 %v569, %v895
      %897 = vmatprep.mubr.f32.mxu0 0.0
      %898 = vmatmul.mubr.f32.gmra.mrb[0].mxu0 %v723
      %v899 = vpop.f32.mrb[0].mxu0
      %v900 = vadd.f32 %v574, %v899
      %v901 = vpop.f32.mrb[0].mxu0
      %v902 = vadd.f32 %v574, %v901
      %903 = vmatprep.mubr.f32.mxu0 0.0
      %904 = vmatmul.mubr.f32.gmra.mrb[0].mxu0 %v726
      %v905 = vpop.f32.mrb[0].mxu0
      %v906 = vadd.f32 %v579, %v905
      %v907 = vpop.f32.mrb[0].mxu0
      %v908 = vadd.f32 %v579, %v907
      %909 = vmatprep.mubr.f32.mxu0 0.0
      %910 = vmatmul.mubr.f32.gmra.mrb[0].mxu0 %v729
      %v911 = vpop.f32.mrb[0].mxu0
      %v912 = vadd.f32 %v584, %v911
      %v913 = vpop.f32.mrb[0].mxu0
      %v914 = vadd.f32 %v584, %v913
      %915 = vmatprep.mubr.f32.mxu0 0.0
      %916 = vmatmul.mubr.f32.gmra.mrb[0].mxu0 %v732
      %v917 = vpop.f32.mrb[0].mxu0
      %v918 = vadd.f32 %v589, %v917
      %v919 = vpop.f32.mrb[0].mxu0
      %v920 = vadd.f32 %v589, %v919
      %921 = vmatprep.mubr.f32.mxu0 0.0
      %922 = vmatmul.mubr.f32.gmra.mrb[0].mxu0 %v735
      %v923 = vpop.f32.mrb[0].mxu0
      %v924 = vadd.f32 %v594, %v923
      %v925 = vpop.f32.mrb[0].mxu0
      %v926 = vadd.f32 %v594, %v925
      %927 = vmatprep.mubr.f32.mxu0 0.0
      %928 = vmatmul.mubr.f32.gmra.mrb[0].mxu0 %v738
      %v929 = vpop.f32.mrb[0].mxu0
      %v930 = vadd.f32 %v599, %v929
      %v931 = vpop.f32.mrb[0].mxu0
      %v932 = vadd.f32 %v599, %v931
      %933 = vmatprep.mubr.f32.mxu0 0.0
      %934 = vmatmul.mubr.f32.gmra.mrb[0].mxu0 %v741
      %v935 = vpop.f32.mrb[0].mxu0
      %v936 = vadd.f32 %v604, %v935
      %v937 = vpop.f32.mrb[0].mxu0
      %v938 = vadd.f32 %v604, %v937
      %939 = vmatprep.mubr.f32.mxu0 0.0
      %940 = vmatmul.mubr.f32.gmra.mrb[0].mxu0 %v744
      %v941 = vpop.f32.mrb[0].mxu0
      %v942 = vadd.f32 %v609, %v941
      %v943 = vpop.f32.mrb[0].mxu0
      %v944 = vadd.f32 %v609, %v943
      %945 = vmatprep.mubr.f32.mxu0 0.0
      %946 = vmatmul.mubr.f32.gmra.mrb[0].mxu0 %v747
      %v947 = vpop.f32.mrb[0].mxu0
      %v948 = vadd.f32 %v614, %v947
      %v949 = vpop.f32.mrb[0].mxu0
      %v950 = vadd.f32 %v614, %v949
      %951 = vmatprep.mubr.f32.mxu0 0.0
      %952 = vmatmul.mubr.f32.gmra.mrb[0].mxu0 %v750
      %v953 = vpop.f32.mrb[0].mxu0
      %v954 = vadd.f32 %v619, %v953
      %v955 = vpop.f32.mrb[0].mxu0
      %v956 = vadd.f32 %v619, %v955
      %957 = vmatprep.mubr.f32.mxu0 0.0
      %958 = vmatmul.mubr.f32.gmra.mrb[0].mxu0 %v753
      %v959 = vpop.f32.mrb[0].mxu0
      %v960 = vadd.f32 %v624, %v959
      %v961 = vpop.f32.mrb[0].mxu0
      %v962 = vadd.f32 %v624, %v961
      %963 = vmatprep.mubr.f32.mxu0 0.0
      %964 = vmatmul.mubr.f32.gmra.mrb[0].mxu0 %v756
      %v965 = vpop.f32.mrb[0].mxu0
      %v966 = vadd.f32 %v629, %v965
      %v967 = vpop.f32.mrb[0].mxu0
      %v968 = vadd.f32 %v629, %v967
      %969 = vmatprep.mubr.f32.mxu0 0.0
      %970 = vmatmul.mubr.f32.gmra.mrb[0].mxu0 %v759
      %v971 = vpop.f32.mrb[0].mxu0
      %v972 = vadd.f32 %v634, %v971
      %v973 = vpop.f32.mrb[0].mxu0
      %v974 = vadd.f32 %v634, %v973
      %975 = vmatprep.mubr.f32.mxu0 0.0
      %976 = vmatmul.mubr.f32.gmra.mrb[0].mxu0 %v762
      %v977 = vpop.f32.mrb[0].mxu0
      %v978 = vadd.f32 %v639, %v977
      %v979 = vpop.f32.mrb[0].mxu0
      %v980 = vadd.f32 %v639, %v979
      %981 = vmatprep.mubr.f32.mxu0 0.0
      %982 = vmatmul.mubr.f32.gmra.mrb[0].mxu0 %v765
      %v983 = vpop.f32.mrb[0].mxu0
      %v984 = vadd.f32 %v644, %v983
      %v985 = vpop.f32.mrb[0].mxu0
      %v986 = vadd.f32 %v644, %v985
      %987 = vmatprep.mubr.f32.mxu0 0.0
      %988 = vmatmul.mubr.f32.gmra.mrb[0].mxu0 %v768
      %v989 = vpop.f32.mrb[0].mxu0
      %v990 = vadd.f32 %v649, %v989
      %v991 = vpop.f32.mrb[0].mxu0
      %v992 = vadd.f32 %v649, %v991
      %993 = vmatprep.mubr.f32.mxu0 0.0
      %994 = vmatmul.mubr.f32.gmra.mrb[0].mxu0 %v771
      %v995 = vpop.f32.mrb[0].mxu0
      %v996 = vadd.f32 %v654, %v995
      %v997 = vpop.f32.mrb[0].mxu0
      %v998 = vadd.f32 %v654, %v997
      %999 = vmatprep.mubr.f32.mxu0 0.0
      %1000 = vmatmul.mubr.f32.gmra.mrb[0].mxu0 %v774
      %v1001 = vpop.f32.mrb[0].mxu0
      %v1002 = vadd.f32 %v659, %v1001
      %v1003 = vpop.f32.mrb[0].mxu0
      %v1004 = vadd.f32 %v659, %v1003
      %1005 = vmatprep.mubr.f32.mxu0 0.0
      %1006 = vmatmul.mubr.f32.gmra.mrb[0].mxu0 %v777
      %v1007 = vpop.f32.mrb[0].mxu0
      %v1008 = vadd.f32 %v664, %v1007
      %v1009 = vpop.f32.mrb[0].mxu0
      %v1010 = vadd.f32 %v664, %v1009
      %1011 = vmatprep.mubr.f32.mxu0 0.0
      %1012 = vmatmul.mubr.f32.gmra.mrb[0].mxu0 %v780
      %v1013 = vpop.f32.mrb[0].mxu0
      %v1014 = vadd.f32 %v669, %v1013
      %v1015 = vpop.f32.mrb[0].mxu0
      %v1016 = vadd.f32 %v669, %v1015
      %1017 = vmatprep.mubr.f32.mxu0 0.0
      %1018 = vmatmul.mubr.f32.gmra.mrb[0].mxu0 %v783
      %v1019 = vpop.f32.mrb[0].mxu0
      %v1020 = vadd.f32 %v674, %v1019
      %v1021 = vpop.f32.mrb[0].mxu0
      %v1022 = vadd.f32 %v674, %v1021
      %1023 = vmatprep.mubr.f32.mxu0 0.0
      %1024 = vmatmul.mubr.f32.gmra.mrb[0].mxu0 %v786
      %v1025 = vpop.f32.mrb[0].mxu0
      %v1026 = vadd.f32 %v679, %v1025
      %v1027 = vpop.f32.mrb[0].mxu0
      %v1028 = vadd.f32 %v679, %v1027
      %1029 = vmatprep.mubr.f32.mxu0 0.0
      %1030 = vmatmul.mubr.f32.gmra.mrb[0].mxu0 %v789
      %v1031 = vpop.f32.mrb[0].mxu0
      %v1032 = vadd.f32 %v684, %v1031
      %v1033 = vpop.f32.mrb[0].mxu0
      %v1034 = vadd.f32 %v684, %v1033
      %1035 = vmatprep.mubr.f32.mxu0 0.0
      %1036 = vmatmul.mubr.f32.gmra.mrb[0].mxu0 %v792
      %v1037 = vpop.f32.mrb[0].mxu0
      %v1038 = vadd.f32 %v689, %v1037
      %v1039 = vpop.f32.mrb[0].mxu0
      %v1040 = vadd.f32 %v689, %v1039
      %1041 = vmatprep.mubr.f32.mxu0 0.0
      %1042 = vmatmul.mubr.f32.gmra.mrb[0].mxu0 %v795
      %v1043 = vpop.f32.mrb[0].mxu0
      %v1044 = vadd.f32 %v694, %v1043
      %v1045 = vpop.f32.mrb[0].mxu0
      %v1046 = vadd.f32 %v694, %v1045
      %1047 = vmatprep.mubr.f32.mxu0 0.0
      %1048 = vmatmul.mubr.f32.gmra.mrb[0].mxu0 %v798
      %v1049 = vpop.f32.mrb[0].mxu0
      %v1050 = vadd.f32 %v699, %v1049
      %v1051 = vpop.f32.mrb[0].mxu0
      %v1052 = vadd.f32 %v699, %v1051
      %1053 = vmatprep.mubr.f32.mxu0 0.0
      %1054 = vmatmul.mubr.f32.gmra.mrb[0].mxu0 %v801
      %v1055 = vpop.f32.mrb[0].mxu0
      %v1056 = vadd.f32 %v704, %v1055
      %v1057 = vpop.f32.mrb[0].mxu0
      %v1058 = vadd.f32 %v704, %v1057
      %1059 = vdwg.mxu0
      %v1060 = vmax.f32 %v870, 0.0
      %v1061 = vmax.f32 %v872, 0.0
      %v1062 = vmax.f32 %v876, 0.0
      %v1063 = vmax.f32 %v878, 0.0
      %v1064 = vmax.f32 %v882, 0.0
      %v1065 = vmax.f32 %v884, 0.0
      %v1066 = vmax.f32 %v888, 0.0
      %v1067 = vmax.f32 %v890, 0.0
      %v1068 = vmax.f32 %v894, 0.0
      %v1069 = vmax.f32 %v896, 0.0
      %v1070 = vmax.f32 %v900, 0.0
      %v1071 = vmax.f32 %v902, 0.0
      %v1072 = vmax.f32 %v906, 0.0
      %v1073 = vmax.f32 %v908, 0.0
      %v1074 = vmax.f32 %v912, 0.0
      %v1075 = vmax.f32 %v914, 0.0
      %v1076 = vmax.f32 %v918, 0.0
      %v1077 = vmax.f32 %v920, 0.0
      %v1078 = vmax.f32 %v924, 0.0
      %v1079 = vmax.f32 %v926, 0.0
      %v1080 = vmax.f32 %v930, 0.0
      %v1081 = vmax.f32 %v932, 0.0
      %v1082 = vmax.f32 %v936, 0.0
      %v1083 = vmax.f32 %v938, 0.0
      %v1084 = vmax.f32 %v942, 0.0
      %v1085 = vmax.f32 %v944, 0.0
      %v1086 = vmax.f32 %v948, 0.0
      %v1087 = vmax.f32 %v950, 0.0
      %v1088 = vmax.f32 %v954, 0.0
      %v1089 = vmax.f32 %v956, 0.0
      %v1090 = vmax.f32 %v960, 0.0
      %v1091 = vmax.f32 %v962, 0.0
      %v1092 = vmax.f32 %v966, 0.0
      %v1093 = vmax.f32 %v968, 0.0
      %v1094 = vmax.f32 %v972, 0.0
      %v1095 = vmax.f32 %v974, 0.0
      %v1096 = vmax.f32 %v978, 0.0
      %v1097 = vmax.f32 %v980, 0.0
      %v1098 = vmax.f32 %v984, 0.0
      %v1099 = vmax.f32 %v986, 0.0
      %v1100 = vmax.f32 %v990, 0.0
      %v1101 = vmax.f32 %v992, 0.0
      %v1102 = vmax.f32 %v996, 0.0
      %v1103 = vmax.f32 %v998, 0.0
      %v1104 = vmax.f32 %v1002, 0.0
      %v1105 = vmax.f32 %v1004, 0.0
      %v1106 = vmax.f32 %v1008, 0.0
      %v1107 = vmax.f32 %v1010, 0.0
      %v1108 = vmax.f32 %v1014, 0.0
      %v1109 = vmax.f32 %v1016, 0.0
      %v1110 = vmax.f32 %v1020, 0.0
      %v1111 = vmax.f32 %v1022, 0.0
      %v1112 = vmax.f32 %v1026, 0.0
      %v1113 = vmax.f32 %v1028, 0.0
      %v1114 = vmax.f32 %v1032, 0.0
      %v1115 = vmax.f32 %v1034, 0.0
      %v1116 = vmax.f32 %v1038, 0.0
      %v1117 = vmax.f32 %v1040, 0.0
      %v1118 = vmax.f32 %v1044, 0.0
      %v1119 = vmax.f32 %v1046, 0.0
      %v1120 = vmax.f32 %v1050, 0.0
      %v1121 = vmax.f32 %v1052, 0.0
      %v1122 = vmax.f32 %v1056, 0.0
      %v1123 = vmax.f32 %v1058, 0.0
      %1124 = vst [vmem:[%s262] sm:$0xff] %v1060
      %1125 = vst [vmem:[%s262 + $0x8] sm:$0xff] %v1061
      %1126 = vst [vmem:[%s262 + $0x10] sm:$0xff] %v1062
      %1127 = vst [vmem:[%s262 + $0x18] sm:$0xff] %v1063
      %1128 = vst [vmem:[%s262 + $0x20] sm:$0xff] %v1064
      %1129 = vst [vmem:[%s262 + $0x28] sm:$0xff] %v1065
      %1130 = vst [vmem:[%s262 + $0x30] sm:$0xff] %v1066
      %1131 = vst [vmem:[%s262 + $0x38] sm:$0xff] %v1067
      %1132 = vst [vmem:[%s262 + $0x40] sm:$0xff] %v1068
      %1133 = vst [vmem:[%s262 + $0x48] sm:$0xff] %v1069
      %1134 = vst [vmem:[%s262 + $0x50] sm:$0xff] %v1070
      %1135 = vst [vmem:[%s262 + $0x58] sm:$0xff] %v1071
      %1136 = vst [vmem:[%s262 + $0x60] sm:$0xff] %v1072
      %1137 = vst [vmem:[%s262 + $0x68] sm:$0xff] %v1073
      %1138 = vst [vmem:[%s262 + $0x70] sm:$0xff] %v1074
      %1139 = vst [vmem:[%s262 + $0x78] sm:$0xff] %v1075
      %1140 = vst [vmem:[%s262 + $0x80] sm:$0xff] %v1076
      %1141 = vst [vmem:[%s262 + $0x88] sm:$0xff] %v1077
      %1142 = vst [vmem:[%s262 + $0x90] sm:$0xff] %v1078
      %1143 = vst [vmem:[%s262 + $0x98] sm:$0xff] %v1079
      %1144 = vst [vmem:[%s262 + $0xa0] sm:$0xff] %v1080
      %1145 = vst [vmem:[%s262 + $0xa8] sm:$0xff] %v1081
      %1146 = vst [vmem:[%s262 + $0xb0] sm:$0xff] %v1082
      %1147 = vst [vmem:[%s262 + $0xb8] sm:$0xff] %v1083
      %1148 = vst [vmem:[%s262 + $0xc0] sm:$0xff] %v1084
      %1149 = vst [vmem:[%s262 + $0xc8] sm:$0xff] %v1085
      %1150 = vst [vmem:[%s262 + $0xd0] sm:$0xff] %v1086
      %1151 = vst [vmem:[%s262 + $0xd8] sm:$0xff] %v1087
      %1152 = vst [vmem:[%s262 + $0xe0] sm:$0xff] %v1088
      %1153 = vst [vmem:[%s262 + $0xe8] sm:$0xff] %v1089
      %1154 = vst [vmem:[%s262 + $0xf0] sm:$0xff] %v1090
      %1155 = vst [vmem:[%s262 + $0xf8] sm:$0xff] %v1091
      %1156 = vst [vmem:[%s262 + $0x100] sm:$0xff] %v1092
      %1157 = vst [vmem:[%s262 + $0x108] sm:$0xff] %v1093
      %1158 = vst [vmem:[%s262 + $0x110] sm:$0xff] %v1094
      %1159 = vst [vmem:[%s262 + $0x118] sm:$0xff] %v1095
      %1160 = vst [vmem:[%s262 + $0x120] sm:$0xff] %v1096
      %1161 = vst [vmem:[%s262 + $0x128] sm:$0xff] %v1097
      %1162 = vst [vmem:[%s262 + $0x130] sm:$0xff] %v1098
      %1163 = vst [vmem:[%s262 + $0x138] sm:$0xff] %v1099
      %1164 = vst [vmem:[%s262 + $0x140] sm:$0xff] %v1100
      %1165 = vst [vmem:[%s262 + $0x148] sm:$0xff] %v1101
      %1166 = vst [vmem:[%s262 + $0x150] sm:$0xff] %v1102
      %1167 = vst [vmem:[%s262 + $0x158] sm:$0xff] %v1103
      %1168 = vst [vmem:[%s262 + $0x160] sm:$0xff] %v1104
      %1169 = vst [vmem:[%s262 + $0x168] sm:$0xff] %v1105
      %1170 = vst [vmem:[%s262 + $0x170] sm:$0xff] %v1106
      %1171 = vst [vmem:[%s262 + $0x178] sm:$0xff] %v1107
      %1172 = vst [vmem:[%s262 + $0x180] sm:$0xff] %v1108
      %1173 = vst [vmem:[%s262 + $0x188] sm:$0xff] %v1109
      %1174 = vst [vmem:[%s262 + $0x190] sm:$0xff] %v1110
      %1175 = vst [vmem:[%s262 + $0x198] sm:$0xff] %v1111
      %1176 = vst [vmem:[%s262 + $0x1a0] sm:$0xff] %v1112
      %1177 = vst [vmem:[%s262 + $0x1a8] sm:$0xff] %v1113
      %1178 = vst [vmem:[%s262 + $0x1b0] sm:$0xff] %v1114
      %1179 = vst [vmem:[%s262 + $0x1b8] sm:$0xff] %v1115
      %1180 = vst [vmem:[%s262 + $0x1c0] sm:$0xff] %v1116
      %1181 = vst [vmem:[%s262 + $0x1c8] sm:$0xff] %v1117
      %1182 = vst [vmem:[%s262 + $0x1d0] sm:$0xff] %v1118
      %1183 = vst [vmem:[%s262 + $0x1d8] sm:$0xff] %v1119
      %1184 = vst [vmem:[%s262 + $0x1e0] sm:$0xff] %v1120
      %1185 = vst [vmem:[%s262 + $0x1e8] sm:$0xff] %v1121
      %1186 = vst [vmem:[%s262 + $0x1f0] sm:$0xff] %v1122
      %1187 = vst [vmem:[%s262 + $0x1f8] sm:$0xff] %v1123
      %s1188 = smul.u32 2, %s21
      %p1189 = scmp.lt.s32.totalorder %s20, 1
      %s1190 = scalar_select %p1189, %s20, 1
      %p1191 = scmp.lt.s32.totalorder %s1188, 1
      %s1192 = scalar_select %p1191, %s1188, 1
      %s1193 = smul.addr %s1190, 64
      %s1194 = sadd.s32 %s1192, %s1193
      %s1195 = smul.addr %s1194, 8
      %s1196 = scalar_lea.vmem %s5, %s1195
      // Predicated region
      $region41: #{csph_decoding_layer_fwd.1} parent=39 // pred_check
        %p1197 = pneg %p160
      $region42: #{csph_decoding_layer_fwd.1} parent=39 // pred_check_branch
        %1199 = sbr.rel (%p1197) target = $region44
      $region43: #{csph_decoding_layer_fwd.1} parent=39 // pred_region
        %s1200 = smul.u32 2, %s21
      $region44: #{csph_decoding_layer_fwd.1} parent=39 // pred_fallthru
        _
    $region40: #{csph_decoding_layer_fwd.1} parent=5 // pred_fallthru
      _
    %p1201 = scmp.le.s32.totalorder 2, %s11
    // Predicated region
    $region45: #{csph_decoding_layer_fwd.1} parent=5 // pred_check
      %p1202 = pneg %p1201
    $region46: #{csph_decoding_layer_fwd.1} parent=5 // pred_check_branch
      %1204 = sbr.rel (%p1202) target = $region48
    $region47: #{csph_decoding_layer_fwd.1} parent=5 // pred_region
      %s1205 = ssub.s32 %s11, 2
      // Predicated region
      $region49: #{csph_decoding_layer_fwd.1} parent=47 // pred_check
        %p1206 = pneg %p166
      $region50: #{csph_decoding_layer_fwd.1} parent=47 // pred_check_branch
        %1208 = sbr.rel (%p1206) target = $region52
      $region51: #{csph_decoding_layer_fwd.1} parent=47 // pred_region
        %s1209 = smul.u32 2, %s23
        %p1210 = scmp.lt.s32.totalorder %s22, 1
        %s1211 = scalar_select %p1210, %s22, 1
        %p1212 = scmp.lt.s32.totalorder %s1209, 1
        %s1213 = scalar_select %p1212, %s1209, 1
        %s1214 = smul.addr %s1211, 64
        %s1215 = sadd.s32 %s1213, %s1214
        %s1216 = smul.addr %s1215, 8
        %s1217 = scalar_lea.vmem %s5, %s1216
      $region52: #{csph_decoding_layer_fwd.1} parent=47 // pred_fallthru
        _
    $region48: #{csph_decoding_layer_fwd.1} parent=5 // pred_fallthru
      _
  $region6: #{csph_decoding_layer_fwd.1} parent=0 // loop_footer
    %s15 = sadd.s32 1, %s11
  $region7: #{csph_decoding_layer_fwd.1} parent=0 // loop_footer_branch
    %10 = sbr.rel target = $region3
  $region8: #{csph_decoding_layer_fwd.1} parent=0 // loop_exit
    _

</llo_original>
